<compile_context>
chip_gen: v7x
topology: tpu7x:2x2x1
jax: 0.10.0
libtpu: 0.0.40
codegen_flags: <defaults>
</compile_context>

<pallas_src>
import functools

import jax
import jax.numpy as jnp
from jax.experimental import pallas as pl
from jax.experimental.pallas import tpu as pltpu


def _pdice_tile_kernel(x_ref, t_ref, oi_ref, oy_ref, oz_ref,
                       acc_i, acc_y, acc_z, *,
                       ignore_index, n_classes, hw, thw, tiles_per_core,
                       need_mask):
    """One grid step handles one spatial tile (all classes at once).

    x_ref : (B, C, THW)  scores tile (native layout), any float dtype
    t_ref : (B, THW)     int32 labels tile
    o*_ref: (1, C, 1)    per-core partial sums, written on the last tile
    acc_* : (C, THW) f32 scratch -- lane-wise partial accumulators
    """
    p = pl.program_id(0)
    t_idx = pl.program_id(1)

    @pl.when(t_idx == 0)
    def _init():
        acc_i[...] = jnp.zeros_like(acc_i)
        acc_y[...] = jnp.zeros_like(acc_y)
        acc_z[...] = jnp.zeros_like(acc_z)

    x = x_ref[...].astype(jnp.float32)          # (B, C, THW)
    labels = t_ref[...]                         # (B, THW) int32

    keep = labels != ignore_index               # ignore mask, (B, THW)
    if need_mask:
        # Ragged last tile: columns beyond HW hold unspecified padding.
        tile_idx = p * tiles_per_core + t_idx
        col = tile_idx * thw + jax.lax.broadcasted_iota(jnp.int32, labels.shape, 1)
        valid = col < hw
        keep = jnp.logical_and(keep, valid)
        # Zero out-of-bounds score garbage so it cannot poison sums (inf*0=NaN).
        x = jnp.where(valid[:, None, :], x, 0.0)

    # Class-invariant work, computed once per tile:
    mask_b = jnp.sum(keep.astype(jnp.float32), axis=0, keepdims=True)   # (1, THW)

    # Per-class membership over all classes at once.
    cls = jax.lax.broadcasted_iota(jnp.int32, (1, n_classes, thw), 1)
    eq = labels[:, None, :] == cls                                      # (B, C, THW)

    # Batch-sums first (reproduces the (B,B,H,W) broadcast after factoring).
    st = jnp.sum(jnp.where(eq, x, 0.0), axis=0)   # (C, THW) sum_b score*target
    tt = jnp.sum(eq.astype(jnp.float32), axis=0)  # (C, THW) sum_b target*target
    ss = jnp.sum(x * x, axis=0)                   # (C, THW) sum_b score*score

    # Lane-wise accumulation; cross-lane reduce deferred to finalize.
    acc_i[...] += st * mask_b
    acc_y[...] += tt * mask_b
    acc_z[...] += ss * mask_b

    @pl.when(t_idx == pl.num_programs(1) - 1)
    def _finalize():
        oi_ref[0] = jnp.sum(acc_i[...], axis=-1, keepdims=True)         # (C, 1)
        oy_ref[0] = jnp.sum(acc_y[...], axis=-1, keepdims=True)
        oz_ref[0] = jnp.sum(acc_z[...], axis=-1, keepdims=True)


def _choose_tile(hw, b, c, itemsize):
    """Pick THW so the working set fits scoped VMEM on v5e/v6e/v7x."""
    if hw <= 128:
        return hw                                   # single full tile
    # Rough bytes of VMEM consumed per lane of tile width:
    #   double-buffered score block + f32 intermediates + labels + scratch rows.
    per_lane = (2 * b * c * itemsize) + (4 * b * c * 4) + (2 * b * 4) + (3 * max(c, 8) * 4)
    budget = 10 * 1024 * 1024                       # safe on v5e / v6e / v7x
    if hw * per_lane <= budget:
        return hw                                   # whole image: no ragged tail
    cap = max(128, min((budget // per_lane) // 128 * 128, 8192))
    # Prefer a multiple-of-128 tile that divides HW exactly (skips tail masking),
    # but never shrink below ~3/4 of the cap (tiny tiles kill DMA efficiency).
    lo = max(128, (cap * 3 // 4) // 128 * 128)
    for thw in range(cap, lo - 1, -128):
        if hw % thw == 0:
            return thw
    return min(cap, (hw // 128) * 128)


def pdloss_pallas(inputs, target, *, n_classes, ignore_index, weight=None,
                  tile_hw=None):
    """inputs: (B, C, H, W) float scores; target: (B, 1, H, W) int labels."""
    B, C, H, W = inputs.shape
    assert C == n_classes, "predict & target shape do not match"
    HW = H * W

    x = inputs.reshape(B, C, HW)                    # free reshape, native layout
    t = target.reshape(B, HW).astype(jnp.int32)
    if weight is None:
        w = jnp.ones((n_classes,), jnp.float32)
    else:
        w = jnp.asarray(weight, jnp.float32)
        assert w.shape == (n_classes,), "weight must have n_classes entries"

    itemsize = x.dtype.itemsize
    thw = int(tile_hw) if tile_hw is not None else _choose_tile(HW, B, C, itemsize)
    num_tiles = -(-HW // thw)
    # Split spatial tiles across the (up to) 2 TensorCores of a v7x chip.
    P = 2 if (num_tiles % 2 == 0 and num_tiles >= 2) else 1
    T = num_tiles // P
    need_mask = (num_tiles * thw) != HW

    kernel = functools.partial(
        _pdice_tile_kernel,
        ignore_index=ignore_index, n_classes=C, hw=HW, thw=thw,
        tiles_per_core=T, need_mask=need_mask)

    part_shape = jax.ShapeDtypeStruct((P, C, 1), jnp.float32)
    part_spec = pl.BlockSpec((1, C, 1), lambda p, ti: (p, 0, 0))

    vmem_need = (2 * B * C * thw * itemsize         # double-buffered scores
                 + 2 * B * thw * 4                  # double-buffered labels
                 + 3 * max(C, 8) * thw * 4)         # scratch accumulators
    vmem_limit = int(min(max(2 * vmem_need + (8 << 20), 32 << 20), 64 << 20))

    cost = pl.CostEstimate(
        flops=int(8 * B * C * HW),
        transcendentals=0,
        bytes_accessed=int(B * C * HW * itemsize + B * HW * 4),
    )

    i_part, y_part, z_part = pl.pallas_call(
        kernel,
        out_shape=(part_shape, part_shape, part_shape),
        grid=(P, T),
        in_specs=[
            pl.BlockSpec((B, C, thw), lambda p, ti: (0, 0, p * T + ti)),  # scores tile
            pl.BlockSpec((B, thw), lambda p, ti: (0, p * T + ti)),        # labels tile
        ],
        out_specs=(part_spec, part_spec, part_spec),
        scratch_shapes=[
            pltpu.VMEM((C, thw), jnp.float32),
            pltpu.VMEM((C, thw), jnp.float32),
            pltpu.VMEM((C, thw), jnp.float32),
        ],
        compiler_params=pltpu.CompilerParams(
            dimension_semantics=("parallel", "arbitrary"),
            vmem_limit_bytes=vmem_limit),
        cost_estimate=cost,
    )(x, t)

    # Tiny per-class finalization in plain JAX (combines the per-core partials).
    intersect = jnp.sum(i_part[..., 0], axis=0)     # (C,)
    y_sum = jnp.sum(y_part[..., 0], axis=0)
    z_sum = jnp.sum(z_part[..., 0], axis=0)
    smooth = 1e-05
    dice = 1.0 - (2.0 * intersect + smooth) / (z_sum + y_sum + smooth)
    # TODO(synk): the reference also builds a host-side `class_wise_dice` list via
    # .item(); only the returned loss is reproduced here.
    return jnp.sum(dice * w) / n_classes


def _numpy_reference(inputs, target, n_classes, ignore_index, weight=None):
    """Direct NumPy transcription of the PyTorch forward (incl. broadcasting)."""
    import numpy as np
    inputs = np.asarray(inputs, np.float32)
    target = np.asarray(target, np.int64)           # (B, 1, H, W)
    if weight is None:
        weight = [1.0] * n_classes
    mask = np.ones_like(target, dtype=np.float32)
    mask[target == ignore_index] = 0.0              # (B, 1, H, W)
    smooth = 1e-05
    loss = 0.0
    for i in range(n_classes):
        s = inputs[:, i]                                    # (B, H, W)
        tg = (target[:, 0] == i).astype(np.float32)         # (B, H, W)
        intersect = np.sum(s * tg * mask)                   # broadcasts to (B,B,H,W)
        y_sum = np.sum(tg * tg * mask)
        z_sum = np.sum(s * s * mask)
        dice = 1.0 - (2.0 * intersect + smooth) / (z_sum + y_sum + smooth)
        loss += dice * weight[i]
    return loss / n_classes


if __name__ == "__main__":
    import numpy as np

    ignore_index = 255
    key = jax.random.PRNGKey(0)
    k1, k2, k3, k4 = jax.random.split(key, 4)

    # Test 1: small canonical shape, single tile, default auto-tiling.
    B, C, H, W = 2, 4, 16, 16
    logits = jax.random.normal(k1, (B, C, H, W), jnp.float32)
    inputs = jax.nn.softmax(logits, axis=1)                     # (B, C, H, W)
    target = jax.random.randint(k2, (B, 1, H, W), 0, C + 1, jnp.int32)
    target = jnp.where(target == C, ignore_index, target)       # exercise ignore mask

    loss = pdloss_pallas(inputs, target, n_classes=C, ignore_index=ignore_index)
    loss = jax.block_until_ready(loss)
    ref = _numpy_reference(inputs, target, C, ignore_index)
    np.testing.assert_allclose(float(loss), float(ref), rtol=1e-4, atol=1e-5)

    # Test 2: multi-tile + 2-way parallel split + ragged last tile + class weights.
    B2, C2, H2, W2 = 2, 5, 24, 20            # HW = 480; tile_hw=128 -> 4 tiles, P=2
    w2 = [0.5, 1.0, 2.0, 1.5, 0.25]
    logits2 = jax.random.normal(k3, (B2, C2, H2, W2), jnp.float32)
    inputs2 = jax.nn.softmax(logits2, axis=1)
    target2 = jax.random.randint(k4, (B2, 1, H2, W2), 0, C2 + 1, jnp.int32)
    target2 = jnp.where(target2 == C2, ignore_index, target2)

    loss2 = pdloss_pallas(inputs2, target2, n_classes=C2,
                          ignore_index=ignore_index, weight=w2, tile_hw=128)
    loss2 = jax.block_until_ready(loss2)
    ref2 = _numpy_reference(inputs2, target2, C2, ignore_index, weight=w2)
    np.testing.assert_allclose(float(loss2), float(ref2), rtol=1e-4, atol=1e-5)

    # Test 3: same data, auto-tiling -> single full-width (480) tile, no tail mask.
    loss3 = pdloss_pallas(inputs2, target2, n_classes=C2,
                          ignore_index=ignore_index, weight=w2)
    loss3 = jax.block_until_ready(loss3)
    np.testing.assert_allclose(float(loss3), float(ref2), rtol=1e-4, atol=1e-5)

    print("KERNEL_OK")
</pallas_src>

<mosaic_0001>
module attributes {stable_mosaic.version = 11 : i64} {
  func.func @_pdice_tile_kernel(%arg0: i32, %arg1: i32, %arg2: memref<2x4x256xf32, #tpu.memory_space<vmem>>, %arg3: memref<2x256xi32, #tpu.memory_space<vmem>>, %arg4: memref<1x4x1xf32, #tpu.memory_space<vmem>>, %arg5: memref<1x4x1xf32, #tpu.memory_space<vmem>>, %arg6: memref<1x4x1xf32, #tpu.memory_space<vmem>>, %arg7: memref<4x256xf32, #tpu.memory_space<vmem>>, %arg8: memref<4x256xf32, #tpu.memory_space<vmem>>, %arg9: memref<4x256xf32, #tpu.memory_space<vmem>>) attributes {dimension_semantics = [#tpu.dimension_semantics<parallel>, #tpu.dimension_semantics<arbitrary>], iteration_bounds = array<i64: 1, 1>, scalar_prefetch = 0 : i64, scratch_operands = 3 : i64, tpu.core_type = #tpu.core_type<tc>, window_params = [{transform_indices = @transform_0, window_bounds = array<i64: 2, 4, 256>}, {transform_indices = @transform_1, window_bounds = array<i64: 2, 256>}, {transform_indices = @transform_2, window_bounds = array<i64: 1, 4, 1>}, {transform_indices = @transform_3, window_bounds = array<i64: 1, 4, 1>}, {transform_indices = @transform_4, window_bounds = array<i64: 1, 4, 1>}]} {
    %c0_i32 = arith.constant 0 : i32
    %0 = arith.cmpi eq, %arg1, %c0_i32 : i32
    %1 = arith.extui %0 : i1 to i32
    %c0_i32_0 = arith.constant 0 : i32
    %2 = arith.cmpi ne, %1, %c0_i32_0 : i32
    scf.if %2 {
      %cst_23 = arith.constant 0.000000e+00 : f32
      %42 = vector.broadcast %cst_23 : f32 to vector<4x256xf32>
      %c0_24 = arith.constant 0 : index
      %c0_25 = arith.constant 0 : index
      %43 = vector.load %arg7[%c0_24, %c0_25] : memref<4x256xf32, #tpu.memory_space<vmem>>, vector<4x256xf32>
      tpu.vector_store %arg7[%c0_24, %c0_25], %42 {strides = array<i32>} : memref<4x256xf32, #tpu.memory_space<vmem>>, vector<4x256xf32>,
      %cst_26 = arith.constant 0.000000e+00 : f32
      %44 = vector.broadcast %cst_26 : f32 to vector<4x256xf32>
      %c0_27 = arith.constant 0 : index
      %c0_28 = arith.constant 0 : index
      %45 = vector.load %arg8[%c0_27, %c0_28] : memref<4x256xf32, #tpu.memory_space<vmem>>, vector<4x256xf32>
      tpu.vector_store %arg8[%c0_27, %c0_28], %44 {strides = array<i32>} : memref<4x256xf32, #tpu.memory_space<vmem>>, vector<4x256xf32>,
      %cst_29 = arith.constant 0.000000e+00 : f32
      %46 = vector.broadcast %cst_29 : f32 to vector<4x256xf32>
      %c0_30 = arith.constant 0 : index
      %c0_31 = arith.constant 0 : index
      %47 = vector.load %arg9[%c0_30, %c0_31] : memref<4x256xf32, #tpu.memory_space<vmem>>, vector<4x256xf32>
      tpu.vector_store %arg9[%c0_30, %c0_31], %46 {strides = array<i32>} : memref<4x256xf32, #tpu.memory_space<vmem>>, vector<4x256xf32>,
    } else {
    }
    %c0 = arith.constant 0 : index
    %c0_1 = arith.constant 0 : index
    %c0_2 = arith.constant 0 : index
    %3 = vector.load %arg2[%c0, %c0_1, %c0_2] : memref<2x4x256xf32, #tpu.memory_space<vmem>>, vector<2x4x256xf32>
    %c0_3 = arith.constant 0 : index
    %c0_4 = arith.constant 0 : index
    %4 = vector.load %arg3[%c0_3, %c0_4] : memref<2x256xi32, #tpu.memory_space<vmem>>, vector<2x256xi32>
    %c255_i32 = arith.constant 255 : i32
    %5 = vector.broadcast %c255_i32 : i32 to vector<2x256xi32>
    %6 = arith.cmpi ne, %4, %5 : vector<2x256xi32>
    %7 = arith.extui %6 : vector<2x256xi1> to vector<2x256xi32>
    %8 = arith.sitofp %7 : vector<2x256xi32> to vector<2x256xf32>
    %cst = arith.constant dense<0.000000e+00> : vector<256xf32>
    %9 = vector.multi_reduction <add>, %8, %cst [0] : vector<2x256xf32> to vector<256xf32>
    %10 = vector.shape_cast %9 : vector<256xf32> to vector<1x256xf32>
    %11 = tpu.iota {dimensions = array<i32: 1>} : vector<1x4x256xi32>
    %12 = vector.shape_cast %4 : vector<2x256xi32> to vector<2x1x256xi32>
    %13 = vector.broadcast %12 : vector<2x1x256xi32> to vector<2x4x256xi32>
    %14 = vector.broadcast %11 : vector<1x4x256xi32> to vector<2x4x256xi32>
    %15 = arith.cmpi eq, %13, %14 : vector<2x4x256xi32>
    %cst_5 = arith.constant 0.000000e+00 : f32
    %16 = vector.broadcast %cst_5 : f32 to vector<2x4x256xf32>
    %17 = arith.select %15, %3, %16 : vector<2x4x256xi1>, vector<2x4x256xf32>
    %cst_6 = arith.constant dense<0.000000e+00> : vector<4x256xf32>
    %18 = vector.multi_reduction <add>, %17, %cst_6 [0] : vector<2x4x256xf32> to vector<4x256xf32>
    %19 = arith.extui %15 : vector<2x4x256xi1> to vector<2x4x256xi32>
    %20 = arith.sitofp %19 : vector<2x4x256xi32> to vector<2x4x256xf32>
    %cst_7 = arith.constant dense<0.000000e+00> : vector<4x256xf32>
    %21 = vector.multi_reduction <add>, %20, %cst_7 [0] : vector<2x4x256xf32> to vector<4x256xf32>
    %22 = arith.mulf %3, %3 : vector<2x4x256xf32>
    %cst_8 = arith.constant dense<0.000000e+00> : vector<4x256xf32>
    %23 = vector.multi_reduction <add>, %22, %cst_8 [0] : vector<2x4x256xf32> to vector<4x256xf32>
    %c0_9 = arith.constant 0 : index
    %c0_10 = arith.constant 0 : index
    %24 = vector.load %arg7[%c0_9, %c0_10] : memref<4x256xf32, #tpu.memory_space<vmem>>, vector<4x256xf32>
    %25 = vector.broadcast %10 : vector<1x256xf32> to vector<4x256xf32>
    %26 = arith.mulf %18, %25 : vector<4x256xf32>
    %27 = arith.addf %24, %26 : vector<4x256xf32>
    %c0_11 = arith.constant 0 : index
    %c0_12 = arith.constant 0 : index
    %28 = vector.load %arg7[%c0_11, %c0_12] : memref<4x256xf32, #tpu.memory_space<vmem>>, vector<4x256xf32>
    tpu.vector_store %arg7[%c0_11, %c0_12], %27 {strides = array<i32>} : memref<4x256xf32, #tpu.memory_space<vmem>>, vector<4x256xf32>,
    %c0_13 = arith.constant 0 : index
    %c0_14 = arith.constant 0 : index
    %29 = vector.load %arg8[%c0_13, %c0_14] : memref<4x256xf32, #tpu.memory_space<vmem>>, vector<4x256xf32>
    %30 = vector.broadcast %10 : vector<1x256xf32> to vector<4x256xf32>
    %31 = arith.mulf %21, %30 : vector<4x256xf32>
    %32 = arith.addf %29, %31 : vector<4x256xf32>
    %c0_15 = arith.constant 0 : index
    %c0_16 = arith.constant 0 : index
    %33 = vector.load %arg8[%c0_15, %c0_16] : memref<4x256xf32, #tpu.memory_space<vmem>>, vector<4x256xf32>
    tpu.vector_store %arg8[%c0_15, %c0_16], %32 {strides = array<i32>} : memref<4x256xf32, #tpu.memory_space<vmem>>, vector<4x256xf32>,
    %c0_17 = arith.constant 0 : index
    %c0_18 = arith.constant 0 : index
    %34 = vector.load %arg9[%c0_17, %c0_18] : memref<4x256xf32, #tpu.memory_space<vmem>>, vector<4x256xf32>
    %35 = vector.broadcast %10 : vector<1x256xf32> to vector<4x256xf32>
    %36 = arith.mulf %23, %35 : vector<4x256xf32>
    %37 = arith.addf %34, %36 : vector<4x256xf32>
    %c0_19 = arith.constant 0 : index
    %c0_20 = arith.constant 0 : index
    %38 = vector.load %arg9[%c0_19, %c0_20] : memref<4x256xf32, #tpu.memory_space<vmem>>, vector<4x256xf32>
    tpu.vector_store %arg9[%c0_19, %c0_20], %37 {strides = array<i32>} : memref<4x256xf32, #tpu.memory_space<vmem>>, vector<4x256xf32>,
    %c0_i32_21 = arith.constant 0 : i32
    %39 = arith.cmpi eq, %arg1, %c0_i32_21 : i32
    %40 = arith.extui %39 : i1 to i32
    %c0_i32_22 = arith.constant 0 : i32
    %41 = arith.cmpi ne, %40, %c0_i32_22 : i32
    scf.if %41 {
      %c0_23 = arith.constant 0 : index
      %c0_24 = arith.constant 0 : index
      %42 = vector.load %arg7[%c0_23, %c0_24] : memref<4x256xf32, #tpu.memory_space<vmem>>, vector<4x256xf32>
      %cst_25 = arith.constant dense<0.000000e+00> : vector<4xf32>
      %43 = vector.multi_reduction <add>, %42, %cst_25 [1] : vector<4x256xf32> to vector<4xf32>
      %44 = vector.shape_cast %43 : vector<4xf32> to vector<4x1xf32>
      %c0_26 = arith.constant 0 : index
      %c0_27 = arith.constant 0 : index
      %c0_28 = arith.constant 0 : index
      %45 = vector.load %arg4[%c0_26, %c0_27, %c0_28] : memref<1x4x1xf32, #tpu.memory_space<vmem>>, vector<1x4x1xf32>
      %46 = vector.shape_cast %45 : vector<1x4x1xf32> to vector<4x1xf32>
      %47 = vector.shape_cast %44 : vector<4x1xf32> to vector<1x4x1xf32>
      tpu.vector_store %arg4[%c0_26, %c0_27, %c0_28], %47 {strides = array<i32>} : memref<1x4x1xf32, #tpu.memory_space<vmem>>, vector<1x4x1xf32>,
      %c0_29 = arith.constant 0 : index
      %c0_30 = arith.constant 0 : index
      %48 = vector.load %arg8[%c0_29, %c0_30] : memref<4x256xf32, #tpu.memory_space<vmem>>, vector<4x256xf32>
      %cst_31 = arith.constant dense<0.000000e+00> : vector<4xf32>
      %49 = vector.multi_reduction <add>, %48, %cst_31 [1] : vector<4x256xf32> to vector<4xf32>
      %50 = vector.shape_cast %49 : vector<4xf32> to vector<4x1xf32>
      %c0_32 = arith.constant 0 : index
      %c0_33 = arith.constant 0 : index
      %c0_34 = arith.constant 0 : index
      %51 = vector.load %arg5[%c0_32, %c0_33, %c0_34] : memref<1x4x1xf32, #tpu.memory_space<vmem>>, vector<1x4x1xf32>
      %52 = vector.shape_cast %51 : vector<1x4x1xf32> to vector<4x1xf32>
      %53 = vector.shape_cast %50 : vector<4x1xf32> to vector<1x4x1xf32>
      tpu.vector_store %arg5[%c0_32, %c0_33, %c0_34], %53 {strides = array<i32>} : memref<1x4x1xf32, #tpu.memory_space<vmem>>, vector<1x4x1xf32>,
      %c0_35 = arith.constant 0 : index
      %c0_36 = arith.constant 0 : index
      %54 = vector.load %arg9[%c0_35, %c0_36] : memref<4x256xf32, #tpu.memory_space<vmem>>, vector<4x256xf32>
      %cst_37 = arith.constant dense<0.000000e+00> : vector<4xf32>
      %55 = vector.multi_reduction <add>, %54, %cst_37 [1] : vector<4x256xf32> to vector<4xf32>
      %56 = vector.shape_cast %55 : vector<4xf32> to vector<4x1xf32>
      %c0_38 = arith.constant 0 : index
      %c0_39 = arith.constant 0 : index
      %c0_40 = arith.constant 0 : index
      %57 = vector.load %arg6[%c0_38, %c0_39, %c0_40] : memref<1x4x1xf32, #tpu.memory_space<vmem>>, vector<1x4x1xf32>
      %58 = vector.shape_cast %57 : vector<1x4x1xf32> to vector<4x1xf32>
      %59 = vector.shape_cast %56 : vector<4x1xf32> to vector<1x4x1xf32>
      tpu.vector_store %arg6[%c0_38, %c0_39, %c0_40], %59 {strides = array<i32>} : memref<1x4x1xf32, #tpu.memory_space<vmem>>, vector<1x4x1xf32>,
    } else {
    }
    return
  }
  func.func @transform_0(%arg0: i32, %arg1: i32) -> (i32, i32, i32) {
    %c1_i32 = arith.constant 1 : i32
    %0 = arith.muli %arg0, %c1_i32 : i32
    %1 = arith.addi %0, %arg1 : i32
    %c0_i32 = arith.constant 0 : i32
    %c0_i32_0 = arith.constant 0 : i32
    %c0_i32_1 = arith.constant 0 : i32
    return %c0_i32, %c0_i32_0, %1 : i32, i32, i32
  }
  func.func @transform_1(%arg0: i32, %arg1: i32) -> (i32, i32) {
    %c1_i32 = arith.constant 1 : i32
    %0 = arith.muli %arg0, %c1_i32 : i32
    %1 = arith.addi %0, %arg1 : i32
    %c0_i32 = arith.constant 0 : i32
    %c0_i32_0 = arith.constant 0 : i32
    return %c0_i32, %1 : i32, i32
  }
  func.func @transform_2(%arg0: i32, %arg1: i32) -> (i32, i32, i32) {
    %c0_i32 = arith.constant 0 : i32
    %c0_i32_0 = arith.constant 0 : i32
    %c0_i32_1 = arith.constant 0 : i32
    return %arg0, %c0_i32, %c0_i32_0 : i32, i32, i32
  }
  func.func @transform_3(%arg0: i32, %arg1: i32) -> (i32, i32, i32) {
    %c0_i32 = arith.constant 0 : i32
    %c0_i32_0 = arith.constant 0 : i32
    %c0_i32_1 = arith.constant 0 : i32
    return %arg0, %c0_i32, %c0_i32_0 : i32, i32, i32
  }
  func.func @transform_4(%arg0: i32, %arg1: i32) -> (i32, i32, i32) {
    %c0_i32 = arith.constant 0 : i32
    %c0_i32_0 = arith.constant 0 : i32
    %c0_i32_1 = arith.constant 0 : i32
    return %arg0, %c0_i32, %c0_i32_0 : i32, i32, i32
  }
}

</mosaic_0001>

<llo_original>
// kernel: tpu_custom_call.1
$region0: #{tpu_custom_call.1}
  #allocation0 [shape = 'u32[]', space=smem, size = 0x4, offset = 0x4, fixed_abs, tag = 'smem constant byte address 0x4 - core index']
  #allocation1 [shape = 'u32[144,128]{1,0:T(1,128)}', space=vmem, size = 0x12000, scoped, tag = 'internal scratch']
  #allocation2 [shape = 'f32[4,256]{1,0:T(4,128)}', space=vmem, size = 0x1000, scoped, tag = 'scratch operand']
  #allocation3 [shape = 'f32[4,256]{1,0:T(4,128)}', space=vmem, size = 0x1000, scoped, tag = 'scratch operand']
  #allocation4 [shape = 'f32[4,256]{1,0:T(4,128)}', space=vmem, size = 0x1000, scoped, tag = 'scratch operand']
  %s0 = inlined_call_operand.hbm [shape: f32[2,4,256], index: 0, kind: input, shape index: {}]
  %s1 = inlined_call_operand.hbm [shape: s32[2,256], index: 1, kind: input, shape index: {}]
  %s2 = inlined_call_operand.vmem [shape: f32[1,4,1], index: 2, kind: output, shape index: {0}]
  %s3 = inlined_call_operand.vmem [shape: f32[1,4,1], index: 3, kind: output, shape index: {1}]
  %s4 = inlined_call_operand.vmem [shape: f32[1,4,1], index: 4, kind: output, shape index: {2}]
  %5 = xla_tuple %s2, %s3, %s4
  %s6 = sld [smem:[#allocation0]]
  $region50: #{tpu_custom_call.1} parent=0
    _
  %s8 = ssub.s32 1, %s6
  %s9 = scalar_select 0, %s8, %s6
  $region1: #{tpu_custom_call.1} parent=0
    #allocation5 [shape = 'u8[8192]{0}', space=vmem, size = 0x2000, scoped, tag = 'input window, operand 0, single buffered']
    #allocation6 [shape = 's32[1]{0}', space=sflag, size = 0x4, scoped, tag = 'scoped memory for tpu_custom_call.1']
    #allocation7 [shape = 'u8[2048]{0}', space=vmem, size = 0x800, scoped, tag = 'input window, operand 1, single buffered']
    #allocation8 [shape = 's32[1]{0}', space=sflag, size = 0x4, scoped, tag = 'scoped memory for tpu_custom_call.1']
    %10 = vsyncpa [#allocation6], 0
    %11 = vsyncpa [#allocation8], 0
    // Predicated region
    $region2: #{tpu_custom_call.1} parent=1 // pred_check
      _
    $region3: #{tpu_custom_call.1} parent=1 // pred_check_branch
      %13 = sbr.rel (0) target = $region5
    $region4: #{tpu_custom_call.1} parent=1 // pred_region
      %s14 = sadd.s32 0, 0
      %s15 = smul.u32 2, %s14
      %s17 = ssub.s32 256, 256
      %18 = vsyncadd [#allocation6], %s17
      %s19 = smul.addr %s15, 64
      %s20 = scalar_lea.hbm %s0, %s19
      %s21 = sshll.u32 [#allocation5], 4
      %s22 = int_to_ptr.vmem [resolvable:$true] %s21
      %27 = dma.hbm_to_vmem [thread:$0]  %s20, 256, %s22, [#allocation6], 128, 128, 8
    $region5: #{tpu_custom_call.1} parent=1 // pred_fallthru
      _
    // Predicated region
    $region6: #{tpu_custom_call.1} parent=1 // pred_check
      _
    $region7: #{tpu_custom_call.1} parent=1 // pred_check_branch
      %29 = sbr.rel (0) target = $region9
    $region8: #{tpu_custom_call.1} parent=1 // pred_region
      %s30 = sadd.s32 0, 0
      %s31 = smul.u32 2, %s30
      %s33 = ssub.s32 64, 64
      %34 = vsyncadd [#allocation8], %s33
      %s35 = smul.addr %s31, 32
      %s36 = scalar_lea.hbm %s1, %s35
      %s38 = sshll.u32 [#allocation7], 4
      %s39 = int_to_ptr.vmem [resolvable:$true] %s38
      %41 = dma.hbm_to_vmem [thread:$0]  %s36, 64, %s39, [#allocation8]
    $region9: #{tpu_custom_call.1} parent=1 // pred_fallthru
      _
    // Predicated region
    $region10: #{tpu_custom_call.1} parent=1 // pred_check
      _
    $region11: #{tpu_custom_call.1} parent=1 // pred_check_branch
      %43 = sbr.rel (0) target = $region13
    $region12: #{tpu_custom_call.1} parent=1 // pred_region
      %44 = dma.done [#allocation6], 256
    $region13: #{tpu_custom_call.1} parent=1 // pred_fallthru
      _
    // Predicated region
    $region14: #{tpu_custom_call.1} parent=1 // pred_check
      _
    $region15: #{tpu_custom_call.1} parent=1 // pred_check_branch
      %46 = sbr.rel (0) target = $region17
    $region16: #{tpu_custom_call.1} parent=1 // pred_region
      %47 = dma.done [#allocation8], 64
    $region17: #{tpu_custom_call.1} parent=1 // pred_fallthru
      _
    %s48 = sadd.s32 0, 0
    %s49 = smul.u32 2, %s48
    %s50 = sadd.s32 0, 0
    %s51 = smul.u32 2, %s50
    %p52 = scmp.eq.s32.totalorder 0, 0
    // Predicated region
    $region18: #{tpu_custom_call.1} parent=1 // pred_check
      %p53 = pneg %p52
    $region19: #{tpu_custom_call.1} parent=1 // pred_check_branch
      %55 = sbr.rel (%p53) target = $region21
    $region20: #{tpu_custom_call.1} parent=1 // pred_region
      %56 = vst [vmem:[#allocation2] sm:$0xff] 0.0
      %57 = vst [vmem:[#allocation3] sm:$0xff] 0.0
      %58 = vst [vmem:[#allocation4] sm:$0xff] 0.0
    $region21: #{tpu_custom_call.1} parent=1 // pred_fallthru
      _
    %v59 = vld [vmem:[#allocation5] sm:$0xff]
    %v60 = vld [vmem:[#allocation5 + $0x8] sm:$0xff]
    %v61 = vld [vmem:[#allocation7] sm:$0xf]
    %vm62 = vcmp.ne.s32.totalorder %v61, 255
    %v63 = vsel %vm62, 1, 0
    %v64 = vcvt.s32.f32 %v63
    %v67 = vunpack.c.l.s4 1983009808
    %v68 = vunpack.c.0.s8 %v67
    %v69 = vlaneseq
    %v70 = vshrl.u32 %v69, 7
    %v71 = vsub.s32 %v68, %v70
    %v72 = vrot.slane %v64, %v71
    %v73 = vcombine.high %v72, %v72
    %vm76 = vcmask 1041408
    %v77 = vsel %vm76, %v72, 0.0
    %v78 = vrot.slane %v77, 4
    %v79 = vadd.f32 %v77, %v78
    %v80 = vrot.slane %v79, 2
    %v81 = vadd.f32 %v79, %v80
    %v82 = vrot.slane %v81, 1
    %v83 = vadd.f32 %v81, %v82
    %v84 = vsel %vm76, %v73, 0.0
    %v85 = vrot.slane %v84, 4
    %v86 = vadd.f32 %v84, %v85
    %v87 = vrot.slane %v86, 2
    %v88 = vadd.f32 %v86, %v87
    %v89 = vrot.slane %v88, 1
    %v90 = vadd.f32 %v88, %v89
    %v91 = vlaneseq
    %v92 = vshrl.u32 %v91, 7
    %v94 = vunpack.c.l.s4 1966171168
    %v95 = vunpack.c.0.s8 %v94
    %v96 = vlaneseq
    %v97 = vshrl.u32 %v96, 7
    %v98 = vsub.s32 %v95, %v97
    %v99 = vrot.slane %v61, %v98
    %v100 = vcombine.high %v99, %v99
    %v101 = vlaneseq
    %v102 = vshrl.u32 %v101, 7
    %v103 = vsub.s32 0, %v102
    %v104 = vrot.slane %v99, %v103
    %v105 = vlaneseq
    %v106 = vshrl.u32 %v105, 7
    %v107 = vsub.s32 1, %v106
    %v108 = vrot.slane %v99, %v107
    %v109 = vlaneseq
    %v110 = vshrl.u32 %v109, 7
    %v111 = vsub.s32 0, %v110
    %v112 = vrot.slane %v100, %v111
    %v113 = vlaneseq
    %v114 = vshrl.u32 %v113, 7
    %v115 = vsub.s32 1, %v114
    %v116 = vrot.slane %v100, %v115
    %vm117 = vcmp.eq.s32.totalorder %v104, %v92
    %vm118 = vcmp.eq.s32.totalorder %v108, %v92
    %vm119 = vcmp.eq.s32.totalorder %v112, %v92
    %vm120 = vcmp.eq.s32.totalorder %v116, %v92
    %v123 = vcombine.high %v59, %v59
    %v124 = vcombine.high %v60, %v60
    %v127 = vsel %vm117, %v59, 0.0
    %v128 = vsel %vm118, %v123, 0.0
    %v129 = vsel %vm119, %v60, 0.0
    %v130 = vsel %vm120, %v124, 0.0
    %vm131 = vcmask 1043456
    %v132 = vsel %vm131, %v127, 0.0
    %v133 = vsel %vm131, %v129, 0.0
    %v134 = vadd.f32 %v132, %v133
    %v135 = vsel %vm131, %v128, 0.0
    %v136 = vsel %vm131, %v130, 0.0
    %v137 = vadd.f32 %v135, %v136
    %v138 = vsel %vm117, 1, 0
    %v139 = vsel %vm118, 1, 0
    %v140 = vsel %vm119, 1, 0
    %v141 = vsel %vm120, 1, 0
    %v142 = vcvt.s32.f32 %v138
    %v143 = vcvt.s32.f32 %v139
    %v144 = vcvt.s32.f32 %v140
    %v145 = vcvt.s32.f32 %v141
    %v146 = vsel %vm131, %v142, 0.0
    %v147 = vsel %vm131, %v144, 0.0
    %v148 = vadd.f32 %v146, %v147
    %v149 = vsel %vm131, %v143, 0.0
    %v150 = vsel %vm131, %v145, 0.0
    %v151 = vadd.f32 %v149, %v150
    %v152 = vmul.f32 %v59, %v59
    %v153 = vmul.f32 %v60, %v60
    %v156 = vcombine.high %v152, %v152
    %v157 = vcombine.high %v153, %v153
    %v160 = vsel %vm131, %v152, 0.0
    %v161 = vsel %vm131, %v153, 0.0
    %v162 = vadd.f32 %v160, %v161
    %v163 = vsel %vm131, %v156, 0.0
    %v164 = vsel %vm131, %v157, 0.0
    %v165 = vadd.f32 %v163, %v164
    %v166 = vld [vmem:[#allocation2] sm:$0xff]
    %v167 = vmul.f32 %v134, %v83
    %v168 = vmul.f32 %v137, %v90
    %v171 = vcombine.low %v167, %v168
    %v173 = vadd.f32 %v166, %v171
    %174 = vst [vmem:[#allocation2] sm:$0xff] %v173
    %v175 = vld [vmem:[#allocation3] sm:$0xff]
    %v176 = vmul.f32 %v148, %v83
    %v177 = vmul.f32 %v151, %v90
    %v180 = vcombine.low %v176, %v177
    %v182 = vadd.f32 %v175, %v180
    %183 = vst [vmem:[#allocation3] sm:$0xff] %v182
    %v184 = vld [vmem:[#allocation4] sm:$0xff]
    %v185 = vmul.f32 %v162, %v83
    %v186 = vmul.f32 %v165, %v90
    %v189 = vcombine.low %v185, %v186
    %v191 = vadd.f32 %v184, %v189
    %192 = vst [vmem:[#allocation4] sm:$0xff] %v191
    // Predicated region
    $region22: #{tpu_custom_call.1} parent=1 // pred_check
      %p193 = pneg %p52
    $region23: #{tpu_custom_call.1} parent=1 // pred_check_branch
      %195 = sbr.rel (%p193) target = $region25
    $region24: #{tpu_custom_call.1} parent=1 // pred_region
      %v196 = vld [vmem:[#allocation2] sm:$0xff]
      %v198 = vcombine.high %v196, %v196
      %v200 = vsel %vm131, %v196, 0.0
      %v201 = vsel %vm131, %v198, 0.0
      %v202 = vadd.f32 %v200, %v201
      %203 = vadd.xlane.f32.xlu0 %v202
      %v204 = vpop.xlane.xlu0 %203
      %vm205 = vcmask 3072
      %206 = vst.msk [vmem:[%s2] sm:$0xf] %vm205, %v204
      %v207 = vld [vmem:[#allocation3] sm:$0xff]
      %v209 = vcombine.high %v207, %v207
      %v211 = vsel %vm131, %v207, 0.0
      %v212 = vsel %vm131, %v209, 0.0
      %v213 = vadd.f32 %v211, %v212
      %214 = vadd.xlane.f32.xlu0 %v213
      %v215 = vpop.xlane.xlu0 %214
      %216 = vst.msk [vmem:[%s3] sm:$0xf] %vm205, %v215
      %v217 = vld [vmem:[#allocation4] sm:$0xff]
      %v219 = vcombine.high %v217, %v217
      %v221 = vsel %vm131, %v217, 0.0
      %v222 = vsel %vm131, %v219, 0.0
      %v223 = vadd.f32 %v221, %v222
      %224 = vadd.xlane.f32.xlu0 %v223
      %v225 = vpop.xlane.xlu0 %224
      %226 = vst.msk [vmem:[%s4] sm:$0xf] %vm205, %v225
    $region25: #{tpu_custom_call.1} parent=1 // pred_fallthru
      _
    // Predicated region
    $region26: #{tpu_custom_call.1} parent=1 // pred_check
      _
    $region27: #{tpu_custom_call.1} parent=1 // pred_check_branch
      %228 = sbr.rel (0) target = $region29
    $region28: #{tpu_custom_call.1} parent=1 // pred_region
      _
    $region29: #{tpu_custom_call.1} parent=1 // pred_fallthru
      _
    // Predicated region
    $region30: #{tpu_custom_call.1} parent=1 // pred_check
      _
    $region31: #{tpu_custom_call.1} parent=1 // pred_check_branch
      %230 = sbr.rel (0) target = $region33
    $region32: #{tpu_custom_call.1} parent=1 // pred_region
      _
    $region33: #{tpu_custom_call.1} parent=1 // pred_fallthru
      _
    // Predicated region
    $region34: #{tpu_custom_call.1} parent=1 // pred_check
      _
    $region35: #{tpu_custom_call.1} parent=1 // pred_check_branch
      %232 = sbr.rel (0) target = $region37
    $region36: #{tpu_custom_call.1} parent=1 // pred_region
      _
    $region37: #{tpu_custom_call.1} parent=1 // pred_fallthru
      _
    // Predicated region
    $region38: #{tpu_custom_call.1} parent=1 // pred_check
      _
    $region39: #{tpu_custom_call.1} parent=1 // pred_check_branch
      %234 = sbr.rel (0) target = $region41
    $region40: #{tpu_custom_call.1} parent=1 // pred_region
      _
    $region41: #{tpu_custom_call.1} parent=1 // pred_fallthru
      _
    // Predicated region
    $region42: #{tpu_custom_call.1} parent=1 // pred_check
      _
    $region43: #{tpu_custom_call.1} parent=1 // pred_check_branch
      %236 = sbr.rel (0) target = $region45
    $region44: #{tpu_custom_call.1} parent=1 // pred_region
      _
    $region45: #{tpu_custom_call.1} parent=1 // pred_fallthru
      _
    // Predicated region
    $region46: #{tpu_custom_call.1} parent=1 // pred_check
      _
    $region47: #{tpu_custom_call.1} parent=1 // pred_check_branch
      %238 = sbr.rel (0) target = $region49
    $region48: #{tpu_custom_call.1} parent=1 // pred_region
      _
    $region49: #{tpu_custom_call.1} parent=1 // pred_fallthru
      _
    %239 = vsyncpa [#allocation6], 1
    %240 = vsyncpa [#allocation8], 1

</llo_original>
